<compile_context>
chip_gen: v7x
topology: tpu7x:2x2x1
jax: 0.10.0
libtpu: 0.0.40
codegen_flags: <defaults>
</compile_context>

<pallas_src>
import jax
import jax.numpy as jnp
from jax import lax
from jax.experimental import pallas as pl
from jax.experimental.pallas import tpu as pltpu

# ---- model dims (consistent with the module's __init__) ----
N_CLASS = 16     # vocabulary size == output classes
EMB_SIZE = 8
N_HIDDEN = 32
BATCH = 2
SEQ = 8

# ---- hardware-aligned padded dims ----
B_PAD = 8          # sublane multiple
VOCAB_PAD = 128    # lane-dense one-hot / pre_table rows
HID_PAD = 128      # lane-dense hidden
NCLASS_PAD = 128   # lane-dense output

# ---- packed weight-slab row offsets ----
_OFF_PRE = 0                            # pre_table^  [VOCAB_PAD, HID_PAD]
_OFF_WAA = _OFF_PRE + VOCAB_PAD         # W_aa^T      [HID_PAD, HID_PAD]
_OFF_W = _OFF_WAA + HID_PAD             # W^T         [HID_PAD, NCLASS_PAD]
_OFF_B = _OFF_W + HID_PAD               # b           [8, NCLASS_PAD] (row 0 real)
_SLAB_ROWS = _OFF_B + 8                 # 392 rows (sublane-aligned)


def rnn_kernel(ids_ref, slab_ref, out_ref):
    """ids_ref: [SEQ*B_PAD, 1] int32 (time-major).  slab_ref: [392, 128] f32."""
    rows = SEQ * B_PAD

    # Fused embedding + input projection + bias: one exact one-hot matmul
    # against the precomputed pre_table = C @ W_ax^T + b_a (each row of the
    # one-hot has exactly one 1.0, so the gather + bias fold is exact).
    ids = ids_ref[...]                                            # [rows, 1] int32
    col = lax.broadcasted_iota(jnp.int32, (rows, VOCAB_PAD), 1)   # [rows, VOCAB_PAD]
    one_hot = (jnp.broadcast_to(ids, (rows, VOCAB_PAD)) == col).astype(jnp.float32)
    pre_all = jnp.dot(one_hot, slab_ref[_OFF_PRE:_OFF_PRE + VOCAB_PAD, :],
                      preferred_element_type=jnp.float32)         # [rows, HID_PAD]

    # Recurrence: hidden state carried in vregs, time loop statically unrolled.
    # TODO(synk): keep W_aa weight-stationary across the 8 steps via explicit
    # pltpu.matmul_push_rhs / matmul_acc_lhs / matmul_pop (and the v7x MRB
    # in-place accumulate of pre_t) if the bundle dump shows the RHS re-pushed.
    waa = slab_ref[_OFF_WAA:_OFF_WAA + HID_PAD, :]                # [HID_PAD, HID_PAD]
    a = jnp.zeros((B_PAD, HID_PAD), jnp.float32)
    for t in range(SEQ):                                          # static unroll (SEQ=8)
        pre_t = pre_all[t * B_PAD:(t + 1) * B_PAD, :]             # aligned (8,128) tile
        a = jnp.tanh(jnp.dot(a, waa, preferred_element_type=jnp.float32) + pre_t)

    # Output projection (lane-dense [B_PAD, NCLASS_PAD] store, unmasked vst).
    w_out = slab_ref[_OFF_W:_OFF_W + HID_PAD, :]                  # [HID_PAD, NCLASS_PAD]
    b_row = slab_ref[_OFF_B:_OFF_B + 1, :]                        # [1, NCLASS_PAD]
    logits = jnp.dot(a, w_out, preferred_element_type=jnp.float32) + b_row
    out_ref[...] = jnp.tanh(logits)


def prepare_params(params):
    """One-time (per param update) packing of all weights into a single padded slab.

    Kept outside the jitted per-call forward so none of the pads / transposes /
    the table fusion run on the inference path.
    """
    emb, w_ax, w_aa, b_a, w_out, b_out = (
        params["C"], params["W_ax"], params["W_aa"],
        params["b_a"], params["W"], params["b"])

    # Fused embedding + input-projection table (exact: one-hot selects one row).
    pre_table = emb @ w_ax.T + b_a[None, :]                       # [N_CLASS, N_HIDDEN]
    pre_pad = jnp.pad(pre_table,
                      ((0, VOCAB_PAD - N_CLASS), (0, HID_PAD - N_HIDDEN)))
    waa_pad = jnp.pad(w_aa.T, ((0, HID_PAD - N_HIDDEN), (0, HID_PAD - N_HIDDEN)))
    w_pad = jnp.pad(w_out.T, ((0, HID_PAD - N_HIDDEN), (0, NCLASS_PAD - N_CLASS)))
    b_block = jnp.pad(b_out.reshape(1, N_CLASS),
                      ((0, 7), (0, NCLASS_PAD - N_CLASS)))        # [8, NCLASS_PAD], row 0 real

    slab = jnp.concatenate([pre_pad, waa_pad, w_pad, b_block], axis=0)
    assert slab.shape == (_SLAB_ROWS, 128)
    return slab.astype(jnp.float32)


@jax.jit
def text_rnn_forward(token_ids, slab):
    """token_ids: [BATCH, SEQ] int32; slab from prepare_params. Returns [BATCH, N_CLASS]."""
    batch, seq = token_ids.shape

    # Time-major flat token ids, batch padded to the sublane multiple.  These
    # tiny ops are allowed to fuse into the Pallas call (allow_input_fusion).
    ids_tm = jnp.transpose(token_ids.astype(jnp.int32))           # [SEQ, BATCH]
    ids_flat = jnp.pad(ids_tm, ((0, 0), (0, B_PAD - batch))).reshape(seq * B_PAD, 1)

    vmem = pltpu.MemorySpace.VMEM
    full = lambda: pl.BlockSpec(memory_space=vmem)

    # Gridless full-array VMEM specs: total resident data ~260 KiB, so
    # pipelining / tiling would only add per-step overhead at this size.
    # TODO(synk): if BATCH grows, add a batch grid axis with
    # dimension_semantics=("parallel",) to shard across v7x's two TensorCores.
    out_pad = pl.pallas_call(
        rnn_kernel,
        out_shape=jax.ShapeDtypeStruct((B_PAD, NCLASS_PAD), jnp.float32),
        in_specs=[full(), full()],
        out_specs=full(),
        compiler_params=pltpu.CompilerParams(
            allow_input_fusion=[True, False]),
    )(ids_flat, slab)

    return out_pad[:batch, :N_CLASS]


def init_params(key):
    k_emb, k_ax, k_aa, k_w = jax.random.split(key, 4)
    return {
        "C": jax.random.normal(k_emb, (N_CLASS, EMB_SIZE), jnp.float32),
        "W_ax": jax.random.normal(k_ax, (N_HIDDEN, EMB_SIZE), jnp.float32) * 0.1,
        "W_aa": jax.random.normal(k_aa, (N_HIDDEN, N_HIDDEN), jnp.float32) * 0.1,
        "b_a": jnp.ones((N_HIDDEN,), jnp.float32),        # torch.ones([n_hidden])
        "W": jax.random.normal(k_w, (N_CLASS, N_HIDDEN), jnp.float32) * 0.1,
        "b": jnp.ones((N_CLASS,), jnp.float32),           # torch.ones([n_class])
    }


def reference_forward(token_ids, params):
    """Pure-JAX reference mirroring the PyTorch forward exactly."""
    x = jnp.take(params["C"], token_ids, axis=0)          # [B, S, E]
    x = jnp.transpose(x, (1, 0, 2))                       # [S, B, E]
    a = jnp.zeros((token_ids.shape[0], N_HIDDEN), jnp.float32)
    for t in range(x.shape[0]):
        a = jnp.tanh(x[t] @ params["W_ax"].T + a @ params["W_aa"].T + params["b_a"])
    return jnp.tanh(a @ params["W"].T + params["b"])


if __name__ == "__main__":
    key = jax.random.PRNGKey(0)
    k_params, k_ids = jax.random.split(key)
    params = init_params(k_params)
    token_ids = jax.random.randint(k_ids, (BATCH, SEQ), 0, N_CLASS, dtype=jnp.int32)

    slab = prepare_params(params)                 # one-time padded/fused weights
    out = text_rnn_forward(token_ids, slab)
    out = jax.block_until_ready(out)

    ref = reference_forward(token_ids, params)
    assert out.shape == (BATCH, N_CLASS)
    assert jnp.allclose(out, ref, atol=1e-5, rtol=1e-5), "mismatch vs reference"
    print("KERNEL_OK")
</pallas_src>

<mosaic_0001>
module attributes {stable_mosaic.version = 11 : i64} {
  func.func @rnn_kernel(%arg0: memref<64x1xi32, #tpu.memory_space<vmem>>, %arg1: memref<392x128xf32, #tpu.memory_space<vmem>>, %arg2: memref<8x128xf32, #tpu.memory_space<vmem>>) attributes {dimension_semantics = [], scalar_prefetch = 0 : i64, scratch_operands = 0 : i64, tpu.core_type = #tpu.core_type<tc>} {
    %c0 = arith.constant 0 : index
    %c0_0 = arith.constant 0 : index
    %0 = vector.load %arg0[%c0, %c0_0] : memref<64x1xi32, #tpu.memory_space<vmem>>, vector<64x1xi32>
    %1 = tpu.iota {dimensions = array<i32: 1>} : vector<64x128xi32>
    %2 = vector.shape_cast %0 : vector<64x1xi32> to vector<64x1xi32>
    %3 = vector.broadcast %2 : vector<64x1xi32> to vector<64x128xi32>
    %4 = arith.cmpi eq, %3, %1 : vector<64x128xi32>
    %5 = arith.extui %4 : vector<64x128xi1> to vector<64x128xi32>
    %6 = arith.sitofp %5 : vector<64x128xi32> to vector<64x128xf32>
    %c0_1 = arith.constant 0 : index
    %c0_2 = arith.constant 0 : index
    %7 = vector.load %arg1[%c0_1, %c0_2] : memref<392x128xf32, #tpu.memory_space<vmem>>, vector<128x128xf32>
    %cst = arith.constant dense<0.000000e+00> : vector<64x128xf32>
    %8 = tpu.matmul %6, %7, %cst {dimension_numbers = #tpu.dot_dimension_numbers<[1], [0], [0], [1], [0, 0, 1, 1], [], []>} : vector<64x128xf32>, vector<128x128xf32>, vector<64x128xf32> -> vector<64x128xf32>
    %c128 = arith.constant 128 : index
    %c0_3 = arith.constant 0 : index
    %9 = vector.load %arg1[%c128, %c0_3] : memref<392x128xf32, #tpu.memory_space<vmem>>, vector<128x128xf32>
    %cst_4 = arith.constant 0.000000e+00 : f32
    %10 = vector.broadcast %cst_4 : f32 to vector<8x128xf32>
    %11 = vector.extract_strided_slice %8 {offsets = [0, 0], sizes = [8, 128], strides = [1, 1]} : vector<64x128xf32> to vector<8x128xf32>
    %cst_5 = arith.constant dense<0.000000e+00> : vector<8x128xf32>
    %12 = tpu.matmul %10, %9, %cst_5 {dimension_numbers = #tpu.dot_dimension_numbers<[1], [0], [0], [1], [0, 0, 1, 1], [], []>} : vector<8x128xf32>, vector<128x128xf32>, vector<8x128xf32> -> vector<8x128xf32>
    %13 = arith.addf %12, %11 : vector<8x128xf32>
    %14 = math.tanh %13 : vector<8x128xf32>
    %15 = vector.extract_strided_slice %8 {offsets = [8, 0], sizes = [8, 128], strides = [1, 1]} : vector<64x128xf32> to vector<8x128xf32>
    %cst_6 = arith.constant dense<0.000000e+00> : vector<8x128xf32>
    %16 = tpu.matmul %14, %9, %cst_6 {dimension_numbers = #tpu.dot_dimension_numbers<[1], [0], [0], [1], [0, 0, 1, 1], [], []>} : vector<8x128xf32>, vector<128x128xf32>, vector<8x128xf32> -> vector<8x128xf32>
    %17 = arith.addf %16, %15 : vector<8x128xf32>
    %18 = math.tanh %17 : vector<8x128xf32>
    %19 = vector.extract_strided_slice %8 {offsets = [16, 0], sizes = [8, 128], strides = [1, 1]} : vector<64x128xf32> to vector<8x128xf32>
    %cst_7 = arith.constant dense<0.000000e+00> : vector<8x128xf32>
    %20 = tpu.matmul %18, %9, %cst_7 {dimension_numbers = #tpu.dot_dimension_numbers<[1], [0], [0], [1], [0, 0, 1, 1], [], []>} : vector<8x128xf32>, vector<128x128xf32>, vector<8x128xf32> -> vector<8x128xf32>
    %21 = arith.addf %20, %19 : vector<8x128xf32>
    %22 = math.tanh %21 : vector<8x128xf32>
    %23 = vector.extract_strided_slice %8 {offsets = [24, 0], sizes = [8, 128], strides = [1, 1]} : vector<64x128xf32> to vector<8x128xf32>
    %cst_8 = arith.constant dense<0.000000e+00> : vector<8x128xf32>
    %24 = tpu.matmul %22, %9, %cst_8 {dimension_numbers = #tpu.dot_dimension_numbers<[1], [0], [0], [1], [0, 0, 1, 1], [], []>} : vector<8x128xf32>, vector<128x128xf32>, vector<8x128xf32> -> vector<8x128xf32>
    %25 = arith.addf %24, %23 : vector<8x128xf32>
    %26 = math.tanh %25 : vector<8x128xf32>
    %27 = vector.extract_strided_slice %8 {offsets = [32, 0], sizes = [8, 128], strides = [1, 1]} : vector<64x128xf32> to vector<8x128xf32>
    %cst_9 = arith.constant dense<0.000000e+00> : vector<8x128xf32>
    %28 = tpu.matmul %26, %9, %cst_9 {dimension_numbers = #tpu.dot_dimension_numbers<[1], [0], [0], [1], [0, 0, 1, 1], [], []>} : vector<8x128xf32>, vector<128x128xf32>, vector<8x128xf32> -> vector<8x128xf32>
    %29 = arith.addf %28, %27 : vector<8x128xf32>
    %30 = math.tanh %29 : vector<8x128xf32>
    %31 = vector.extract_strided_slice %8 {offsets = [40, 0], sizes = [8, 128], strides = [1, 1]} : vector<64x128xf32> to vector<8x128xf32>
    %cst_10 = arith.constant dense<0.000000e+00> : vector<8x128xf32>
    %32 = tpu.matmul %30, %9, %cst_10 {dimension_numbers = #tpu.dot_dimension_numbers<[1], [0], [0], [1], [0, 0, 1, 1], [], []>} : vector<8x128xf32>, vector<128x128xf32>, vector<8x128xf32> -> vector<8x128xf32>
    %33 = arith.addf %32, %31 : vector<8x128xf32>
    %34 = math.tanh %33 : vector<8x128xf32>
    %35 = vector.extract_strided_slice %8 {offsets = [48, 0], sizes = [8, 128], strides = [1, 1]} : vector<64x128xf32> to vector<8x128xf32>
    %cst_11 = arith.constant dense<0.000000e+00> : vector<8x128xf32>
    %36 = tpu.matmul %34, %9, %cst_11 {dimension_numbers = #tpu.dot_dimension_numbers<[1], [0], [0], [1], [0, 0, 1, 1], [], []>} : vector<8x128xf32>, vector<128x128xf32>, vector<8x128xf32> -> vector<8x128xf32>
    %37 = arith.addf %36, %35 : vector<8x128xf32>
    %38 = math.tanh %37 : vector<8x128xf32>
    %39 = vector.extract_strided_slice %8 {offsets = [56, 0], sizes = [8, 128], strides = [1, 1]} : vector<64x128xf32> to vector<8x128xf32>
    %cst_12 = arith.constant dense<0.000000e+00> : vector<8x128xf32>
    %40 = tpu.matmul %38, %9, %cst_12 {dimension_numbers = #tpu.dot_dimension_numbers<[1], [0], [0], [1], [0, 0, 1, 1], [], []>} : vector<8x128xf32>, vector<128x128xf32>, vector<8x128xf32> -> vector<8x128xf32>
    %41 = arith.addf %40, %39 : vector<8x128xf32>
    %42 = math.tanh %41 : vector<8x128xf32>
    %c256 = arith.constant 256 : index
    %c0_13 = arith.constant 0 : index
    %43 = vector.load %arg1[%c256, %c0_13] : memref<392x128xf32, #tpu.memory_space<vmem>>, vector<128x128xf32>
    %c384 = arith.constant 384 : index
    %c0_14 = arith.constant 0 : index
    %44 = vector.load %arg1[%c384, %c0_14] : memref<392x128xf32, #tpu.memory_space<vmem>>, vector<1x128xf32>
    %cst_15 = arith.constant dense<0.000000e+00> : vector<8x128xf32>
    %45 = tpu.matmul %42, %43, %cst_15 {dimension_numbers = #tpu.dot_dimension_numbers<[1], [0], [0], [1], [0, 0, 1, 1], [], []>} : vector<8x128xf32>, vector<128x128xf32>, vector<8x128xf32> -> vector<8x128xf32>
    %46 = vector.broadcast %44 : vector<1x128xf32> to vector<8x128xf32>
    %47 = arith.addf %45, %46 : vector<8x128xf32>
    %48 = math.tanh %47 : vector<8x128xf32>
    %c0_16 = arith.constant 0 : index
    %c0_17 = arith.constant 0 : index
    %49 = vector.load %arg2[%c0_16, %c0_17] : memref<8x128xf32, #tpu.memory_space<vmem>>, vector<8x128xf32>
    tpu.vector_store %arg2[%c0_16, %c0_17], %48 {strides = array<i32>} : memref<8x128xf32, #tpu.memory_space<vmem>>, vector<8x128xf32>,
    return
  }
}

</mosaic_0001>

<llo_original>
// kernel: text_rnn_forward.1
$region0: #{text_rnn_forward.1}
  #allocation0 [shape = 'u32[]', space=smem, size = 0x4, offset = 0x4, fixed_abs, tag = 'smem constant byte address 0x4 - core index']
  #allocation1 [shape = 'u32[144,128]{1,0:T(1,128)}', space=vmem, size = 0x12000, scoped, tag = 'internal scratch']
  %s0 = inlined_call_operand.vmem [shape: s32[64,1], index: 0, kind: input, shape index: {}]
  %s1 = inlined_call_operand.hbm [shape: f32[392,128], index: 1, kind: input, shape index: {}]
  %s2 = inlined_call_operand.vmem [shape: f32[8,128], index: 2, kind: output, shape index: {}]
  %s3 = sld [smem:[#allocation0]]
  $region22: #{text_rnn_forward.1} parent=0
    _
  %s5 = ssub.s32 1, %s3
  %s6 = scalar_select 0, %s5, %s3
  $region1: #{text_rnn_forward.1} parent=0
    #allocation2 [shape = 'u8[200704]{0}', space=vmem, size = 0x31000, scoped, tag = 'input window, operand 1, single buffered']
    #allocation3 [shape = 's32[1]{0}', space=sflag, size = 0x4, scoped, tag = 'scoped memory for text_rnn_forward.1']
    %7 = vsyncpa [#allocation3], 0
    // Predicated region
    $region2: #{text_rnn_forward.1} parent=1 // pred_check
      _
    $region3: #{text_rnn_forward.1} parent=1 // pred_check_branch
      %9 = sbr.rel (0) target = $region5
    $region4: #{text_rnn_forward.1} parent=1 // pred_region
      _
    $region5: #{text_rnn_forward.1} parent=1 // pred_fallthru
      _
    // Predicated region
    $region6: #{text_rnn_forward.1} parent=1 // pred_check
      _
    $region7: #{text_rnn_forward.1} parent=1 // pred_check_branch
      %11 = sbr.rel (0) target = $region9
    $region8: #{text_rnn_forward.1} parent=1 // pred_region
      %s13 = ssub.s32 6272, 6272
      %14 = vsyncadd [#allocation3], %s13
      %s15 = sshll.u32 [#allocation2], 4
      %s16 = int_to_ptr.vmem [resolvable:$true] %s15
      %21 = dma.hbm_to_vmem [thread:$0]  %s1, 6272, %s16, [#allocation3], 128, 128, 8
    $region9: #{text_rnn_forward.1} parent=1 // pred_fallthru
      _
    // Predicated region
    $region10: #{text_rnn_forward.1} parent=1 // pred_check
      _
    $region11: #{text_rnn_forward.1} parent=1 // pred_check_branch
      %23 = sbr.rel (0) target = $region13
    $region12: #{text_rnn_forward.1} parent=1 // pred_region
      %24 = dma.done [#allocation3], 6272
    $region13: #{text_rnn_forward.1} parent=1 // pred_fallthru
      _
    %v25 = vld [vmem:[%s0] sm:$0xff]
    %v26 = vld [vmem:[%s0 + $0x8] sm:$0xff]
    %v27 = vld [vmem:[%s0 + $0x10] sm:$0xff]
    %v28 = vld [vmem:[%s0 + $0x18] sm:$0xff]
    %v29 = vld [vmem:[%s0 + $0x20] sm:$0xff]
    %v30 = vld [vmem:[%s0 + $0x28] sm:$0xff]
    %v31 = vld [vmem:[%s0 + $0x30] sm:$0xff]
    %v32 = vld [vmem:[%s0 + $0x38] sm:$0xff]
    %v33 = vlaneseq
    %v34 = vand.u32 %v33, 127
    %35 = vset.pattern.permute.xlu0 0
    %36 = vperm.xlu0 %35, %v25
    %v37 = vpop.permute.xlu0 %36
    %38 = vset.pattern.permute.xlu0 0
    %39 = vperm.xlu0 %38, %v26
    %v40 = vpop.permute.xlu0 %39
    %41 = vset.pattern.permute.xlu0 0
    %42 = vperm.xlu0 %41, %v27
    %v43 = vpop.permute.xlu0 %42
    %44 = vset.pattern.permute.xlu0 0
    %45 = vperm.xlu0 %44, %v28
    %v46 = vpop.permute.xlu0 %45
    %47 = vset.pattern.permute.xlu0 0
    %48 = vperm.xlu0 %47, %v29
    %v49 = vpop.permute.xlu0 %48
    %50 = vset.pattern.permute.xlu0 0
    %51 = vperm.xlu0 %50, %v30
    %v52 = vpop.permute.xlu0 %51
    %53 = vset.pattern.permute.xlu0 0
    %54 = vperm.xlu0 %53, %v31
    %v55 = vpop.permute.xlu0 %54
    %56 = vset.pattern.permute.xlu0 0
    %57 = vperm.xlu0 %56, %v32
    %v58 = vpop.permute.xlu0 %57
    %vm59 = vcmp.eq.s32.totalorder %v37, %v34
    %vm60 = vcmp.eq.s32.totalorder %v40, %v34
    %vm61 = vcmp.eq.s32.totalorder %v43, %v34
    %vm62 = vcmp.eq.s32.totalorder %v46, %v34
    %vm63 = vcmp.eq.s32.totalorder %v49, %v34
    %vm64 = vcmp.eq.s32.totalorder %v52, %v34
    %vm65 = vcmp.eq.s32.totalorder %v55, %v34
    %vm66 = vcmp.eq.s32.totalorder %v58, %v34
    %v67 = vsel %vm59, 1, 0
    %v68 = vsel %vm60, 1, 0
    %v69 = vsel %vm61, 1, 0
    %v70 = vsel %vm62, 1, 0
    %v71 = vsel %vm63, 1, 0
    %v72 = vsel %vm64, 1, 0
    %v73 = vsel %vm65, 1, 0
    %v74 = vsel %vm66, 1, 0
    %v75 = vcvt.s32.f32 %v67
    %v76 = vcvt.s32.f32 %v68
    %v77 = vcvt.s32.f32 %v69
    %v78 = vcvt.s32.f32 %v70
    %v79 = vcvt.s32.f32 %v71
    %v80 = vcvt.s32.f32 %v72
    %v81 = vcvt.s32.f32 %v73
    %v82 = vcvt.s32.f32 %v74
    %v83 = vld [vmem:[#allocation2] sm:$0xff]
    %v84 = vld [vmem:[#allocation2 + $0x8] sm:$0xff]
    %v85 = vld [vmem:[#allocation2 + $0x10] sm:$0xff]
    %v86 = vld [vmem:[#allocation2 + $0x18] sm:$0xff]
    %v87 = vld [vmem:[#allocation2 + $0x20] sm:$0xff]
    %v88 = vld [vmem:[#allocation2 + $0x28] sm:$0xff]
    %v89 = vld [vmem:[#allocation2 + $0x30] sm:$0xff]
    %v90 = vld [vmem:[#allocation2 + $0x38] sm:$0xff]
    %v91 = vld [vmem:[#allocation2 + $0x40] sm:$0xff]
    %v92 = vld [vmem:[#allocation2 + $0x48] sm:$0xff]
    %v93 = vld [vmem:[#allocation2 + $0x50] sm:$0xff]
    %v94 = vld [vmem:[#allocation2 + $0x58] sm:$0xff]
    %v95 = vld [vmem:[#allocation2 + $0x60] sm:$0xff]
    %v96 = vld [vmem:[#allocation2 + $0x68] sm:$0xff]
    %v97 = vld [vmem:[#allocation2 + $0x70] sm:$0xff]
    %v98 = vld [vmem:[#allocation2 + $0x78] sm:$0xff]
    %99 = vmatprep.subr.mxu0 0.0
    %100 = vmatpush1.msra.mxu0 %v83
    %101 = vmatprep.subr.mxu0 0.0
    %102 = vmatpush1.msra.mxu0 %v84
    %103 = vmatprep.subr.mxu0 0.0
    %104 = vmatpush1.msra.mxu0 %v85
    %105 = vmatprep.subr.mxu0 0.0
    %106 = vmatpush1.msra.mxu0 %v86
    %107 = vmatprep.subr.mxu0 0.0
    %108 = vmatpush1.msra.mxu0 %v87
    %109 = vmatprep.subr.mxu0 0.0
    %110 = vmatpush1.msra.mxu0 %v88
    %111 = vmatprep.subr.mxu0 0.0
    %112 = vmatpush1.msra.mxu0 %v89
    %113 = vmatprep.subr.mxu0 0.0
    %114 = vmatpush1.msra.mxu0 %v90
    %115 = vmatprep.subr.mxu0 0.0
    %116 = vmatpush1.msra.mxu0 %v91
    %117 = vmatprep.subr.mxu0 0.0
    %118 = vmatpush1.msra.mxu0 %v92
    %119 = vmatprep.subr.mxu0 0.0
    %120 = vmatpush1.msra.mxu0 %v93
    %121 = vmatprep.subr.mxu0 0.0
    %122 = vmatpush1.msra.mxu0 %v94
    %123 = vmatprep.subr.mxu0 0.0
    %124 = vmatpush1.msra.mxu0 %v95
    %125 = vmatprep.subr.mxu0 0.0
    %126 = vmatpush1.msra.mxu0 %v96
    %127 = vmatprep.subr.mxu0 0.0
    %128 = vmatpush1.msra.mxu0 %v97
    %129 = vmatprep.subr.mxu0 0.0
    %130 = vmatpush1.msra.mxu0 %v98
    %131 = vmatprep.subr.mxu0 0.0
    %132 = vmatpush1.msra.mxu0 0.0
    %133 = vmatprep.subr.mxu0 0.0
    %134 = vmatpush1.msra.mxu0 0.0
    %135 = vmatprep.subr.mxu0 0.0
    %136 = vmatpush1.msra.mxu0 0.0
    %137 = vmatprep.subr.mxu0 0.0
    %138 = vmatpush1.msra.mxu0 0.0
    %139 = vmatprep.subr.mxu0 0.0
    %140 = vmatpush1.msra.mxu0 0.0
    %141 = vmatprep.subr.mxu0 0.0
    %142 = vmatpush1.msra.mxu0 0.0
    %143 = vmatprep.subr.mxu0 0.0
    %144 = vmatpush1.msra.mxu0 0.0
    %145 = vmatprep.subr.mxu0 0.0
    %146 = vmatpush1.msra.mxu0 0.0
    %147 = vmatprep.subr.mxu0 0.0
    %148 = vmatpush1.msra.mxu0 0.0
    %149 = vmatprep.subr.mxu0 0.0
    %150 = vmatpush1.msra.mxu0 0.0
    %151 = vmatprep.subr.mxu0 0.0
    %152 = vmatpush1.msra.mxu0 0.0
    %153 = vmatprep.subr.mxu0 0.0
    %154 = vmatpush1.msra.mxu0 0.0
    %155 = vmatprep.subr.mxu0 0.0
    %156 = vmatpush1.msra.mxu0 0.0
    %157 = vmatprep.subr.mxu0 0.0
    %158 = vmatpush1.msra.mxu0 0.0
    %159 = vmatprep.subr.mxu0 0.0
    %160 = vmatpush1.msra.mxu0 0.0
    %161 = vmatprep.subr.mxu0 0.0
    %162 = vmatpush1.msra.mxu0 0.0
    %163 = vmatprep.mubr.f32.mxu0 0.0
    %164 = vmatmul.mubr.f32.gmra.mrb[0].mxu0 %v75
    %v165 = vpop.f32.mrb[0].mxu0
    %v166 = vadd.f32 0.0, %v165
    %v167 = vpop.f32.mrb[0].mxu0
    %168 = vmatprep.mubr.f32.mxu0 0.0
    %169 = vmatmul.mubr.f32.gmra.mrb[0].mxu0 %v76
    %v170 = vpop.f32.mrb[0].mxu0
    %v171 = vadd.f32 0.0, %v170
    %v172 = vpop.f32.mrb[0].mxu0
    %173 = vmatprep.mubr.f32.mxu0 0.0
    %174 = vmatmul.mubr.f32.gmra.mrb[0].mxu0 %v77
    %v175 = vpop.f32.mrb[0].mxu0
    %v176 = vadd.f32 0.0, %v175
    %v177 = vpop.f32.mrb[0].mxu0
    %178 = vmatprep.mubr.f32.mxu0 0.0
    %179 = vmatmul.mubr.f32.gmra.mrb[0].mxu0 %v78
    %v180 = vpop.f32.mrb[0].mxu0
    %v181 = vadd.f32 0.0, %v180
    %v182 = vpop.f32.mrb[0].mxu0
    %183 = vmatprep.mubr.f32.mxu0 0.0
    %184 = vmatmul.mubr.f32.gmra.mrb[0].mxu0 %v79
    %v185 = vpop.f32.mrb[0].mxu0
    %v186 = vadd.f32 0.0, %v185
    %v187 = vpop.f32.mrb[0].mxu0
    %188 = vmatprep.mubr.f32.mxu0 0.0
    %189 = vmatmul.mubr.f32.gmra.mrb[0].mxu0 %v80
    %v190 = vpop.f32.mrb[0].mxu0
    %v191 = vadd.f32 0.0, %v190
    %v192 = vpop.f32.mrb[0].mxu0
    %193 = vmatprep.mubr.f32.mxu0 0.0
    %194 = vmatmul.mubr.f32.gmra.mrb[0].mxu0 %v81
    %v195 = vpop.f32.mrb[0].mxu0
    %v196 = vadd.f32 0.0, %v195
    %v197 = vpop.f32.mrb[0].mxu0
    %198 = vmatprep.mubr.f32.mxu0 0.0
    %199 = vmatmul.mubr.f32.gmra.mrb[0].mxu0 %v82
    %v200 = vpop.f32.mrb[0].mxu0
    %v201 = vadd.f32 0.0, %v200
    %v202 = vpop.f32.mrb[0].mxu0
    %203 = vdwg.mxu0
    %v204 = vld [vmem:[#allocation2 + $0x80] sm:$0xff]
    %v205 = vld [vmem:[#allocation2 + $0x88] sm:$0xff]
    %v206 = vld [vmem:[#allocation2 + $0x90] sm:$0xff]
    %v207 = vld [vmem:[#allocation2 + $0x98] sm:$0xff]
    %v208 = vld [vmem:[#allocation2 + $0xa0] sm:$0xff]
    %v209 = vld [vmem:[#allocation2 + $0xa8] sm:$0xff]
    %v210 = vld [vmem:[#allocation2 + $0xb0] sm:$0xff]
    %v211 = vld [vmem:[#allocation2 + $0xb8] sm:$0xff]
    %v212 = vld [vmem:[#allocation2 + $0xc0] sm:$0xff]
    %v213 = vld [vmem:[#allocation2 + $0xc8] sm:$0xff]
    %v214 = vld [vmem:[#allocation2 + $0xd0] sm:$0xff]
    %v215 = vld [vmem:[#allocation2 + $0xd8] sm:$0xff]
    %v216 = vld [vmem:[#allocation2 + $0xe0] sm:$0xff]
    %v217 = vld [vmem:[#allocation2 + $0xe8] sm:$0xff]
    %v218 = vld [vmem:[#allocation2 + $0xf0] sm:$0xff]
    %v219 = vld [vmem:[#allocation2 + $0xf8] sm:$0xff]
    %220 = vmatprep.subr.mxu0 0.0
    %221 = vmatpush1.msra.mxu0 %v204
    %222 = vmatprep.subr.mxu0 0.0
    %223 = vmatpush1.msra.mxu0 %v205
    %224 = vmatprep.subr.mxu0 0.0
    %225 = vmatpush1.msra.mxu0 %v206
    %226 = vmatprep.subr.mxu0 0.0
    %227 = vmatpush1.msra.mxu0 %v207
    %228 = vmatprep.subr.mxu0 0.0
    %229 = vmatpush1.msra.mxu0 %v208
    %230 = vmatprep.subr.mxu0 0.0
    %231 = vmatpush1.msra.mxu0 %v209
    %232 = vmatprep.subr.mxu0 0.0
    %233 = vmatpush1.msra.mxu0 %v210
    %234 = vmatprep.subr.mxu0 0.0
    %235 = vmatpush1.msra.mxu0 %v211
    %236 = vmatprep.subr.mxu0 0.0
    %237 = vmatpush1.msra.mxu0 %v212
    %238 = vmatprep.subr.mxu0 0.0
    %239 = vmatpush1.msra.mxu0 %v213
    %240 = vmatprep.subr.mxu0 0.0
    %241 = vmatpush1.msra.mxu0 %v214
    %242 = vmatprep.subr.mxu0 0.0
    %243 = vmatpush1.msra.mxu0 %v215
    %244 = vmatprep.subr.mxu0 0.0
    %245 = vmatpush1.msra.mxu0 %v216
    %246 = vmatprep.subr.mxu0 0.0
    %247 = vmatpush1.msra.mxu0 %v217
    %248 = vmatprep.subr.mxu0 0.0
    %249 = vmatpush1.msra.mxu0 %v218
    %250 = vmatprep.subr.mxu0 0.0
    %251 = vmatpush1.msra.mxu0 %v219
    %252 = vmatprep.subr.mxu0 0.0
    %253 = vmatpush1.msra.mxu0 0.0
    %254 = vmatprep.subr.mxu0 0.0
    %255 = vmatpush1.msra.mxu0 0.0
    %256 = vmatprep.subr.mxu0 0.0
    %257 = vmatpush1.msra.mxu0 0.0
    %258 = vmatprep.subr.mxu0 0.0
    %259 = vmatpush1.msra.mxu0 0.0
    %260 = vmatprep.subr.mxu0 0.0
    %261 = vmatpush1.msra.mxu0 0.0
    %262 = vmatprep.subr.mxu0 0.0
    %263 = vmatpush1.msra.mxu0 0.0
    %264 = vmatprep.subr.mxu0 0.0
    %265 = vmatpush1.msra.mxu0 0.0
    %266 = vmatprep.subr.mxu0 0.0
    %267 = vmatpush1.msra.mxu0 0.0
    %268 = vmatprep.subr.mxu0 0.0
    %269 = vmatpush1.msra.mxu0 0.0
    %270 = vmatprep.subr.mxu0 0.0
    %271 = vmatpush1.msra.mxu0 0.0
    %272 = vmatprep.subr.mxu0 0.0
    %273 = vmatpush1.msra.mxu0 0.0
    %274 = vmatprep.subr.mxu0 0.0
    %275 = vmatpush1.msra.mxu0 0.0
    %276 = vmatprep.subr.mxu0 0.0
    %277 = vmatpush1.msra.mxu0 0.0
    %278 = vmatprep.subr.mxu0 0.0
    %279 = vmatpush1.msra.mxu0 0.0
    %280 = vmatprep.subr.mxu0 0.0
    %281 = vmatpush1.msra.mxu0 0.0
    %282 = vmatprep.subr.mxu0 0.0
    %283 = vmatpush1.msra.mxu0 0.0
    %284 = vmatprep.mubr.f32.mxu0 0.0
    %285 = vmatmul.mubr.f32.gmra.mrb[0].mxu0 0.0
    %v286 = vpop.f32.mrb[0].mxu0
    %v287 = vadd.f32 %v166, %v286
    %v288 = vpop.f32.mrb[0].mxu0
    %289 = vdwg.mxu0
    %v290 = vtanh.pop %v287
    %291 = vmatprep.subr.mxu0 0.0
    %292 = vmatpush1.msra.mxu0 %v204
    %293 = vmatprep.subr.mxu0 0.0
    %294 = vmatpush1.msra.mxu0 %v205
    %295 = vmatprep.subr.mxu0 0.0
    %296 = vmatpush1.msra.mxu0 %v206
    %297 = vmatprep.subr.mxu0 0.0
    %298 = vmatpush1.msra.mxu0 %v207
    %299 = vmatprep.subr.mxu0 0.0
    %300 = vmatpush1.msra.mxu0 %v208
    %301 = vmatprep.subr.mxu0 0.0
    %302 = vmatpush1.msra.mxu0 %v209
    %303 = vmatprep.subr.mxu0 0.0
    %304 = vmatpush1.msra.mxu0 %v210
    %305 = vmatprep.subr.mxu0 0.0
    %306 = vmatpush1.msra.mxu0 %v211
    %307 = vmatprep.subr.mxu0 0.0
    %308 = vmatpush1.msra.mxu0 %v212
    %309 = vmatprep.subr.mxu0 0.0
    %310 = vmatpush1.msra.mxu0 %v213
    %311 = vmatprep.subr.mxu0 0.0
    %312 = vmatpush1.msra.mxu0 %v214
    %313 = vmatprep.subr.mxu0 0.0
    %314 = vmatpush1.msra.mxu0 %v215
    %315 = vmatprep.subr.mxu0 0.0
    %316 = vmatpush1.msra.mxu0 %v216
    %317 = vmatprep.subr.mxu0 0.0
    %318 = vmatpush1.msra.mxu0 %v217
    %319 = vmatprep.subr.mxu0 0.0
    %320 = vmatpush1.msra.mxu0 %v218
    %321 = vmatprep.subr.mxu0 0.0
    %322 = vmatpush1.msra.mxu0 %v219
    %323 = vmatprep.subr.mxu0 0.0
    %324 = vmatpush1.msra.mxu0 0.0
    %325 = vmatprep.subr.mxu0 0.0
    %326 = vmatpush1.msra.mxu0 0.0
    %327 = vmatprep.subr.mxu0 0.0
    %328 = vmatpush1.msra.mxu0 0.0
    %329 = vmatprep.subr.mxu0 0.0
    %330 = vmatpush1.msra.mxu0 0.0
    %331 = vmatprep.subr.mxu0 0.0
    %332 = vmatpush1.msra.mxu0 0.0
    %333 = vmatprep.subr.mxu0 0.0
    %334 = vmatpush1.msra.mxu0 0.0
    %335 = vmatprep.subr.mxu0 0.0
    %336 = vmatpush1.msra.mxu0 0.0
    %337 = vmatprep.subr.mxu0 0.0
    %338 = vmatpush1.msra.mxu0 0.0
    %339 = vmatprep.subr.mxu0 0.0
    %340 = vmatpush1.msra.mxu0 0.0
    %341 = vmatprep.subr.mxu0 0.0
    %342 = vmatpush1.msra.mxu0 0.0
    %343 = vmatprep.subr.mxu0 0.0
    %344 = vmatpush1.msra.mxu0 0.0
    %345 = vmatprep.subr.mxu0 0.0
    %346 = vmatpush1.msra.mxu0 0.0
    %347 = vmatprep.subr.mxu0 0.0
    %348 = vmatpush1.msra.mxu0 0.0
    %349 = vmatprep.subr.mxu0 0.0
    %350 = vmatpush1.msra.mxu0 0.0
    %351 = vmatprep.subr.mxu0 0.0
    %352 = vmatpush1.msra.mxu0 0.0
    %353 = vmatprep.subr.mxu0 0.0
    %354 = vmatpush1.msra.mxu0 0.0
    %355 = vmatprep.mubr.f32.mxu0 0.0
    %356 = vmatmul.mubr.f32.gmra.mrb[0].mxu0 %v290
    %v357 = vpop.f32.mrb[0].mxu0
    %v358 = vadd.f32 %v171, %v357
    %v359 = vpop.f32.mrb[0].mxu0
    %360 = vdwg.mxu0
    %v361 = vtanh.pop %v358
    %362 = vmatprep.subr.mxu0 0.0
    %363 = vmatpush1.msra.mxu0 %v204
    %364 = vmatprep.subr.mxu0 0.0
    %365 = vmatpush1.msra.mxu0 %v205
    %366 = vmatprep.subr.mxu0 0.0
    %367 = vmatpush1.msra.mxu0 %v206
    %368 = vmatprep.subr.mxu0 0.0
    %369 = vmatpush1.msra.mxu0 %v207
    %370 = vmatprep.subr.mxu0 0.0
    %371 = vmatpush1.msra.mxu0 %v208
    %372 = vmatprep.subr.mxu0 0.0
    %373 = vmatpush1.msra.mxu0 %v209
    %374 = vmatprep.subr.mxu0 0.0
    %375 = vmatpush1.msra.mxu0 %v210
    %376 = vmatprep.subr.mxu0 0.0
    %377 = vmatpush1.msra.mxu0 %v211
    %378 = vmatprep.subr.mxu0 0.0
    %379 = vmatpush1.msra.mxu0 %v212
    %380 = vmatprep.subr.mxu0 0.0
    %381 = vmatpush1.msra.mxu0 %v213
    %382 = vmatprep.subr.mxu0 0.0
    %383 = vmatpush1.msra.mxu0 %v214
    %384 = vmatprep.subr.mxu0 0.0
    %385 = vmatpush1.msra.mxu0 %v215
    %386 = vmatprep.subr.mxu0 0.0
    %387 = vmatpush1.msra.mxu0 %v216
    %388 = vmatprep.subr.mxu0 0.0
    %389 = vmatpush1.msra.mxu0 %v217
    %390 = vmatprep.subr.mxu0 0.0
    %391 = vmatpush1.msra.mxu0 %v218
    %392 = vmatprep.subr.mxu0 0.0
    %393 = vmatpush1.msra.mxu0 %v219
    %394 = vmatprep.subr.mxu0 0.0
    %395 = vmatpush1.msra.mxu0 0.0
    %396 = vmatprep.subr.mxu0 0.0
    %397 = vmatpush1.msra.mxu0 0.0
    %398 = vmatprep.subr.mxu0 0.0
    %399 = vmatpush1.msra.mxu0 0.0
    %400 = vmatprep.subr.mxu0 0.0
    %401 = vmatpush1.msra.mxu0 0.0
    %402 = vmatprep.subr.mxu0 0.0
    %403 = vmatpush1.msra.mxu0 0.0
    %404 = vmatprep.subr.mxu0 0.0
    %405 = vmatpush1.msra.mxu0 0.0
    %406 = vmatprep.subr.mxu0 0.0
    %407 = vmatpush1.msra.mxu0 0.0
    %408 = vmatprep.subr.mxu0 0.0
    %409 = vmatpush1.msra.mxu0 0.0
    %410 = vmatprep.subr.mxu0 0.0
    %411 = vmatpush1.msra.mxu0 0.0
    %412 = vmatprep.subr.mxu0 0.0
    %413 = vmatpush1.msra.mxu0 0.0
    %414 = vmatprep.subr.mxu0 0.0
    %415 = vmatpush1.msra.mxu0 0.0
    %416 = vmatprep.subr.mxu0 0.0
    %417 = vmatpush1.msra.mxu0 0.0
    %418 = vmatprep.subr.mxu0 0.0
    %419 = vmatpush1.msra.mxu0 0.0
    %420 = vmatprep.subr.mxu0 0.0
    %421 = vmatpush1.msra.mxu0 0.0
    %422 = vmatprep.subr.mxu0 0.0
    %423 = vmatpush1.msra.mxu0 0.0
    %424 = vmatprep.subr.mxu0 0.0
    %425 = vmatpush1.msra.mxu0 0.0
    %426 = vmatprep.mubr.f32.mxu0 0.0
    %427 = vmatmul.mubr.f32.gmra.mrb[0].mxu0 %v361
    %v428 = vpop.f32.mrb[0].mxu0
    %v429 = vadd.f32 %v176, %v428
    %v430 = vpop.f32.mrb[0].mxu0
    %431 = vdwg.mxu0
    %v432 = vtanh.pop %v429
    %433 = vmatprep.subr.mxu0 0.0
    %434 = vmatpush1.msra.mxu0 %v204
    %435 = vmatprep.subr.mxu0 0.0
    %436 = vmatpush1.msra.mxu0 %v205
    %437 = vmatprep.subr.mxu0 0.0
    %438 = vmatpush1.msra.mxu0 %v206
    %439 = vmatprep.subr.mxu0 0.0
    %440 = vmatpush1.msra.mxu0 %v207
    %441 = vmatprep.subr.mxu0 0.0
    %442 = vmatpush1.msra.mxu0 %v208
    %443 = vmatprep.subr.mxu0 0.0
    %444 = vmatpush1.msra.mxu0 %v209
    %445 = vmatprep.subr.mxu0 0.0
    %446 = vmatpush1.msra.mxu0 %v210
    %447 = vmatprep.subr.mxu0 0.0
    %448 = vmatpush1.msra.mxu0 %v211
    %449 = vmatprep.subr.mxu0 0.0
    %450 = vmatpush1.msra.mxu0 %v212
    %451 = vmatprep.subr.mxu0 0.0
    %452 = vmatpush1.msra.mxu0 %v213
    %453 = vmatprep.subr.mxu0 0.0
    %454 = vmatpush1.msra.mxu0 %v214
    %455 = vmatprep.subr.mxu0 0.0
    %456 = vmatpush1.msra.mxu0 %v215
    %457 = vmatprep.subr.mxu0 0.0
    %458 = vmatpush1.msra.mxu0 %v216
    %459 = vmatprep.subr.mxu0 0.0
    %460 = vmatpush1.msra.mxu0 %v217
    %461 = vmatprep.subr.mxu0 0.0
    %462 = vmatpush1.msra.mxu0 %v218
    %463 = vmatprep.subr.mxu0 0.0
    %464 = vmatpush1.msra.mxu0 %v219
    %465 = vmatprep.subr.mxu0 0.0
    %466 = vmatpush1.msra.mxu0 0.0
    %467 = vmatprep.subr.mxu0 0.0
    %468 = vmatpush1.msra.mxu0 0.0
    %469 = vmatprep.subr.mxu0 0.0
    %470 = vmatpush1.msra.mxu0 0.0
    %471 = vmatprep.subr.mxu0 0.0
    %472 = vmatpush1.msra.mxu0 0.0
    %473 = vmatprep.subr.mxu0 0.0
    %474 = vmatpush1.msra.mxu0 0.0
    %475 = vmatprep.subr.mxu0 0.0
    %476 = vmatpush1.msra.mxu0 0.0
    %477 = vmatprep.subr.mxu0 0.0
    %478 = vmatpush1.msra.mxu0 0.0
    %479 = vmatprep.subr.mxu0 0.0
    %480 = vmatpush1.msra.mxu0 0.0
    %481 = vmatprep.subr.mxu0 0.0
    %482 = vmatpush1.msra.mxu0 0.0
    %483 = vmatprep.subr.mxu0 0.0
    %484 = vmatpush1.msra.mxu0 0.0
    %485 = vmatprep.subr.mxu0 0.0
    %486 = vmatpush1.msra.mxu0 0.0
    %487 = vmatprep.subr.mxu0 0.0
    %488 = vmatpush1.msra.mxu0 0.0
    %489 = vmatprep.subr.mxu0 0.0
    %490 = vmatpush1.msra.mxu0 0.0
    %491 = vmatprep.subr.mxu0 0.0
    %492 = vmatpush1.msra.mxu0 0.0
    %493 = vmatprep.subr.mxu0 0.0
    %494 = vmatpush1.msra.mxu0 0.0
    %495 = vmatprep.subr.mxu0 0.0
    %496 = vmatpush1.msra.mxu0 0.0
    %497 = vmatprep.mubr.f32.mxu0 0.0
    %498 = vmatmul.mubr.f32.gmra.mrb[0].mxu0 %v432
    %v499 = vpop.f32.mrb[0].mxu0
    %v500 = vadd.f32 %v181, %v499
    %v501 = vpop.f32.mrb[0].mxu0
    %502 = vdwg.mxu0
    %v503 = vtanh.pop %v500
    %504 = vmatprep.subr.mxu0 0.0
    %505 = vmatpush1.msra.mxu0 %v204
    %506 = vmatprep.subr.mxu0 0.0
    %507 = vmatpush1.msra.mxu0 %v205
    %508 = vmatprep.subr.mxu0 0.0
    %509 = vmatpush1.msra.mxu0 %v206
    %510 = vmatprep.subr.mxu0 0.0
    %511 = vmatpush1.msra.mxu0 %v207
    %512 = vmatprep.subr.mxu0 0.0
    %513 = vmatpush1.msra.mxu0 %v208
    %514 = vmatprep.subr.mxu0 0.0
    %515 = vmatpush1.msra.mxu0 %v209
    %516 = vmatprep.subr.mxu0 0.0
    %517 = vmatpush1.msra.mxu0 %v210
    %518 = vmatprep.subr.mxu0 0.0
    %519 = vmatpush1.msra.mxu0 %v211
    %520 = vmatprep.subr.mxu0 0.0
    %521 = vmatpush1.msra.mxu0 %v212
    %522 = vmatprep.subr.mxu0 0.0
    %523 = vmatpush1.msra.mxu0 %v213
    %524 = vmatprep.subr.mxu0 0.0
    %525 = vmatpush1.msra.mxu0 %v214
    %526 = vmatprep.subr.mxu0 0.0
    %527 = vmatpush1.msra.mxu0 %v215
    %528 = vmatprep.subr.mxu0 0.0
    %529 = vmatpush1.msra.mxu0 %v216
    %530 = vmatprep.subr.mxu0 0.0
    %531 = vmatpush1.msra.mxu0 %v217
    %532 = vmatprep.subr.mxu0 0.0
    %533 = vmatpush1.msra.mxu0 %v218
    %534 = vmatprep.subr.mxu0 0.0
    %535 = vmatpush1.msra.mxu0 %v219
    %536 = vmatprep.subr.mxu0 0.0
    %537 = vmatpush1.msra.mxu0 0.0
    %538 = vmatprep.subr.mxu0 0.0
    %539 = vmatpush1.msra.mxu0 0.0
    %540 = vmatprep.subr.mxu0 0.0
    %541 = vmatpush1.msra.mxu0 0.0
    %542 = vmatprep.subr.mxu0 0.0
    %543 = vmatpush1.msra.mxu0 0.0
    %544 = vmatprep.subr.mxu0 0.0
    %545 = vmatpush1.msra.mxu0 0.0
    %546 = vmatprep.subr.mxu0 0.0
    %547 = vmatpush1.msra.mxu0 0.0
    %548 = vmatprep.subr.mxu0 0.0
    %549 = vmatpush1.msra.mxu0 0.0
    %550 = vmatprep.subr.mxu0 0.0
    %551 = vmatpush1.msra.mxu0 0.0
    %552 = vmatprep.subr.mxu0 0.0
    %553 = vmatpush1.msra.mxu0 0.0
    %554 = vmatprep.subr.mxu0 0.0
    %555 = vmatpush1.msra.mxu0 0.0
    %556 = vmatprep.subr.mxu0 0.0
    %557 = vmatpush1.msra.mxu0 0.0
    %558 = vmatprep.subr.mxu0 0.0
    %559 = vmatpush1.msra.mxu0 0.0
    %560 = vmatprep.subr.mxu0 0.0
    %561 = vmatpush1.msra.mxu0 0.0
    %562 = vmatprep.subr.mxu0 0.0
    %563 = vmatpush1.msra.mxu0 0.0
    %564 = vmatprep.subr.mxu0 0.0
    %565 = vmatpush1.msra.mxu0 0.0
    %566 = vmatprep.subr.mxu0 0.0
    %567 = vmatpush1.msra.mxu0 0.0
    %568 = vmatprep.mubr.f32.mxu0 0.0
    %569 = vmatmul.mubr.f32.gmra.mrb[0].mxu0 %v503
    %v570 = vpop.f32.mrb[0].mxu0
    %v571 = vadd.f32 %v186, %v570
    %v572 = vpop.f32.mrb[0].mxu0
    %573 = vdwg.mxu0
    %v574 = vtanh.pop %v571
    %575 = vmatprep.subr.mxu0 0.0
    %576 = vmatpush1.msra.mxu0 %v204
    %577 = vmatprep.subr.mxu0 0.0
    %578 = vmatpush1.msra.mxu0 %v205
    %579 = vmatprep.subr.mxu0 0.0
    %580 = vmatpush1.msra.mxu0 %v206
    %581 = vmatprep.subr.mxu0 0.0
    %582 = vmatpush1.msra.mxu0 %v207
    %583 = vmatprep.subr.mxu0 0.0
    %584 = vmatpush1.msra.mxu0 %v208
    %585 = vmatprep.subr.mxu0 0.0
    %586 = vmatpush1.msra.mxu0 %v209
    %587 = vmatprep.subr.mxu0 0.0
    %588 = vmatpush1.msra.mxu0 %v210
    %589 = vmatprep.subr.mxu0 0.0
    %590 = vmatpush1.msra.mxu0 %v211
    %591 = vmatprep.subr.mxu0 0.0
    %592 = vmatpush1.msra.mxu0 %v212
    %593 = vmatprep.subr.mxu0 0.0
    %594 = vmatpush1.msra.mxu0 %v213
    %595 = vmatprep.subr.mxu0 0.0
    %596 = vmatpush1.msra.mxu0 %v214
    %597 = vmatprep.subr.mxu0 0.0
    %598 = vmatpush1.msra.mxu0 %v215
    %599 = vmatprep.subr.mxu0 0.0
    %600 = vmatpush1.msra.mxu0 %v216
    %601 = vmatprep.subr.mxu0 0.0
    %602 = vmatpush1.msra.mxu0 %v217
    %603 = vmatprep.subr.mxu0 0.0
    %604 = vmatpush1.msra.mxu0 %v218
    %605 = vmatprep.subr.mxu0 0.0
    %606 = vmatpush1.msra.mxu0 %v219
    %607 = vmatprep.subr.mxu0 0.0
    %608 = vmatpush1.msra.mxu0 0.0
    %609 = vmatprep.subr.mxu0 0.0
    %610 = vmatpush1.msra.mxu0 0.0
    %611 = vmatprep.subr.mxu0 0.0
    %612 = vmatpush1.msra.mxu0 0.0
    %613 = vmatprep.subr.mxu0 0.0
    %614 = vmatpush1.msra.mxu0 0.0
    %615 = vmatprep.subr.mxu0 0.0
    %616 = vmatpush1.msra.mxu0 0.0
    %617 = vmatprep.subr.mxu0 0.0
    %618 = vmatpush1.msra.mxu0 0.0
    %619 = vmatprep.subr.mxu0 0.0
    %620 = vmatpush1.msra.mxu0 0.0
    %621 = vmatprep.subr.mxu0 0.0
    %622 = vmatpush1.msra.mxu0 0.0
    %623 = vmatprep.subr.mxu0 0.0
    %624 = vmatpush1.msra.mxu0 0.0
    %625 = vmatprep.subr.mxu0 0.0
    %626 = vmatpush1.msra.mxu0 0.0
    %627 = vmatprep.subr.mxu0 0.0
    %628 = vmatpush1.msra.mxu0 0.0
    %629 = vmatprep.subr.mxu0 0.0
    %630 = vmatpush1.msra.mxu0 0.0
    %631 = vmatprep.subr.mxu0 0.0
    %632 = vmatpush1.msra.mxu0 0.0
    %633 = vmatprep.subr.mxu0 0.0
    %634 = vmatpush1.msra.mxu0 0.0
    %635 = vmatprep.subr.mxu0 0.0
    %636 = vmatpush1.msra.mxu0 0.0
    %637 = vmatprep.subr.mxu0 0.0
    %638 = vmatpush1.msra.mxu0 0.0
    %639 = vmatprep.mubr.f32.mxu0 0.0
    %640 = vmatmul.mubr.f32.gmra.mrb[0].mxu0 %v574
    %v641 = vpop.f32.mrb[0].mxu0
    %v642 = vadd.f32 %v191, %v641
    %v643 = vpop.f32.mrb[0].mxu0
    %644 = vdwg.mxu0
    %v645 = vtanh.pop %v642
    %646 = vmatprep.subr.mxu0 0.0
    %647 = vmatpush1.msra.mxu0 %v204
    %648 = vmatprep.subr.mxu0 0.0
    %649 = vmatpush1.msra.mxu0 %v205
    %650 = vmatprep.subr.mxu0 0.0
    %651 = vmatpush1.msra.mxu0 %v206
    %652 = vmatprep.subr.mxu0 0.0
    %653 = vmatpush1.msra.mxu0 %v207
    %654 = vmatprep.subr.mxu0 0.0
    %655 = vmatpush1.msra.mxu0 %v208
    %656 = vmatprep.subr.mxu0 0.0
    %657 = vmatpush1.msra.mxu0 %v209
    %658 = vmatprep.subr.mxu0 0.0
    %659 = vmatpush1.msra.mxu0 %v210
    %660 = vmatprep.subr.mxu0 0.0
    %661 = vmatpush1.msra.mxu0 %v211
    %662 = vmatprep.subr.mxu0 0.0
    %663 = vmatpush1.msra.mxu0 %v212
    %664 = vmatprep.subr.mxu0 0.0
    %665 = vmatpush1.msra.mxu0 %v213
    %666 = vmatprep.subr.mxu0 0.0
    %667 = vmatpush1.msra.mxu0 %v214
    %668 = vmatprep.subr.mxu0 0.0
    %669 = vmatpush1.msra.mxu0 %v215
    %670 = vmatprep.subr.mxu0 0.0
    %671 = vmatpush1.msra.mxu0 %v216
    %672 = vmatprep.subr.mxu0 0.0
    %673 = vmatpush1.msra.mxu0 %v217
    %674 = vmatprep.subr.mxu0 0.0
    %675 = vmatpush1.msra.mxu0 %v218
    %676 = vmatprep.subr.mxu0 0.0
    %677 = vmatpush1.msra.mxu0 %v219
    %678 = vmatprep.subr.mxu0 0.0
    %679 = vmatpush1.msra.mxu0 0.0
    %680 = vmatprep.subr.mxu0 0.0
    %681 = vmatpush1.msra.mxu0 0.0
    %682 = vmatprep.subr.mxu0 0.0
    %683 = vmatpush1.msra.mxu0 0.0
    %684 = vmatprep.subr.mxu0 0.0
    %685 = vmatpush1.msra.mxu0 0.0
    %686 = vmatprep.subr.mxu0 0.0
    %687 = vmatpush1.msra.mxu0 0.0
    %688 = vmatprep.subr.mxu0 0.0
    %689 = vmatpush1.msra.mxu0 0.0
    %690 = vmatprep.subr.mxu0 0.0
    %691 = vmatpush1.msra.mxu0 0.0
    %692 = vmatprep.subr.mxu0 0.0
    %693 = vmatpush1.msra.mxu0 0.0
    %694 = vmatprep.subr.mxu0 0.0
    %695 = vmatpush1.msra.mxu0 0.0
    %696 = vmatprep.subr.mxu0 0.0
    %697 = vmatpush1.msra.mxu0 0.0
    %698 = vmatprep.subr.mxu0 0.0
    %699 = vmatpush1.msra.mxu0 0.0
    %700 = vmatprep.subr.mxu0 0.0
    %701 = vmatpush1.msra.mxu0 0.0
    %702 = vmatprep.subr.mxu0 0.0
    %703 = vmatpush1.msra.mxu0 0.0
    %704 = vmatprep.subr.mxu0 0.0
    %705 = vmatpush1.msra.mxu0 0.0
    %706 = vmatprep.subr.mxu0 0.0
    %707 = vmatpush1.msra.mxu0 0.0
    %708 = vmatprep.subr.mxu0 0.0
    %709 = vmatpush1.msra.mxu0 0.0
    %710 = vmatprep.mubr.f32.mxu0 0.0
    %711 = vmatmul.mubr.f32.gmra.mrb[0].mxu0 %v645
    %v712 = vpop.f32.mrb[0].mxu0
    %v713 = vadd.f32 %v196, %v712
    %v714 = vpop.f32.mrb[0].mxu0
    %715 = vdwg.mxu0
    %v716 = vtanh.pop %v713
    %717 = vmatprep.subr.mxu0 0.0
    %718 = vmatpush1.msra.mxu0 %v204
    %719 = vmatprep.subr.mxu0 0.0
    %720 = vmatpush1.msra.mxu0 %v205
    %721 = vmatprep.subr.mxu0 0.0
    %722 = vmatpush1.msra.mxu0 %v206
    %723 = vmatprep.subr.mxu0 0.0
    %724 = vmatpush1.msra.mxu0 %v207
    %725 = vmatprep.subr.mxu0 0.0
    %726 = vmatpush1.msra.mxu0 %v208
    %727 = vmatprep.subr.mxu0 0.0
    %728 = vmatpush1.msra.mxu0 %v209
    %729 = vmatprep.subr.mxu0 0.0
    %730 = vmatpush1.msra.mxu0 %v210
    %731 = vmatprep.subr.mxu0 0.0
    %732 = vmatpush1.msra.mxu0 %v211
    %733 = vmatprep.subr.mxu0 0.0
    %734 = vmatpush1.msra.mxu0 %v212
    %735 = vmatprep.subr.mxu0 0.0
    %736 = vmatpush1.msra.mxu0 %v213
    %737 = vmatprep.subr.mxu0 0.0
    %738 = vmatpush1.msra.mxu0 %v214
    %739 = vmatprep.subr.mxu0 0.0
    %740 = vmatpush1.msra.mxu0 %v215
    %741 = vmatprep.subr.mxu0 0.0
    %742 = vmatpush1.msra.mxu0 %v216
    %743 = vmatprep.subr.mxu0 0.0
    %744 = vmatpush1.msra.mxu0 %v217
    %745 = vmatprep.subr.mxu0 0.0
    %746 = vmatpush1.msra.mxu0 %v218
    %747 = vmatprep.subr.mxu0 0.0
    %748 = vmatpush1.msra.mxu0 %v219
    %749 = vmatprep.subr.mxu0 0.0
    %750 = vmatpush1.msra.mxu0 0.0
    %751 = vmatprep.subr.mxu0 0.0
    %752 = vmatpush1.msra.mxu0 0.0
    %753 = vmatprep.subr.mxu0 0.0
    %754 = vmatpush1.msra.mxu0 0.0
    %755 = vmatprep.subr.mxu0 0.0
    %756 = vmatpush1.msra.mxu0 0.0
    %757 = vmatprep.subr.mxu0 0.0
    %758 = vmatpush1.msra.mxu0 0.0
    %759 = vmatprep.subr.mxu0 0.0
    %760 = vmatpush1.msra.mxu0 0.0
    %761 = vmatprep.subr.mxu0 0.0
    %762 = vmatpush1.msra.mxu0 0.0
    %763 = vmatprep.subr.mxu0 0.0
    %764 = vmatpush1.msra.mxu0 0.0
    %765 = vmatprep.subr.mxu0 0.0
    %766 = vmatpush1.msra.mxu0 0.0
    %767 = vmatprep.subr.mxu0 0.0
    %768 = vmatpush1.msra.mxu0 0.0
    %769 = vmatprep.subr.mxu0 0.0
    %770 = vmatpush1.msra.mxu0 0.0
    %771 = vmatprep.subr.mxu0 0.0
    %772 = vmatpush1.msra.mxu0 0.0
    %773 = vmatprep.subr.mxu0 0.0
    %774 = vmatpush1.msra.mxu0 0.0
    %775 = vmatprep.subr.mxu0 0.0
    %776 = vmatpush1.msra.mxu0 0.0
    %777 = vmatprep.subr.mxu0 0.0
    %778 = vmatpush1.msra.mxu0 0.0
    %779 = vmatprep.subr.mxu0 0.0
    %780 = vmatpush1.msra.mxu0 0.0
    %781 = vmatprep.mubr.f32.mxu0 0.0
    %782 = vmatmul.mubr.f32.gmra.mrb[0].mxu0 %v716
    %v783 = vpop.f32.mrb[0].mxu0
    %v784 = vadd.f32 %v201, %v783
    %v785 = vpop.f32.mrb[0].mxu0
    %786 = vdwg.mxu0
    %v787 = vtanh.pop %v784
    %v788 = vld [vmem:[#allocation2 + $0x100] sm:$0xff]
    %v789 = vld [vmem:[#allocation2 + $0x108] sm:$0xff]
    %v790 = vld [vmem:[#allocation2 + $0x110] sm:$0xff]
    %v791 = vld [vmem:[#allocation2 + $0x118] sm:$0xff]
    %v792 = vld [vmem:[#allocation2 + $0x120] sm:$0xff]
    %v793 = vld [vmem:[#allocation2 + $0x128] sm:$0xff]
    %v794 = vld [vmem:[#allocation2 + $0x130] sm:$0xff]
    %v795 = vld [vmem:[#allocation2 + $0x138] sm:$0xff]
    %v796 = vld [vmem:[#allocation2 + $0x140] sm:$0xff]
    %v797 = vld [vmem:[#allocation2 + $0x148] sm:$0xff]
    %v798 = vld [vmem:[#allocation2 + $0x150] sm:$0xff]
    %v799 = vld [vmem:[#allocation2 + $0x158] sm:$0xff]
    %v800 = vld [vmem:[#allocation2 + $0x160] sm:$0xff]
    %v801 = vld [vmem:[#allocation2 + $0x168] sm:$0xff]
    %v802 = vld [vmem:[#allocation2 + $0x170] sm:$0xff]
    %v803 = vld [vmem:[#allocation2 + $0x178] sm:$0xff]
    %v804 = vld [vmem:[#allocation2 + $0x180] sm:$0x1]
    %v805 = vlaneseq
    %v806 = vshrl.u32 %v805, 7
    %v807 = vsub.s32 0, %v806
    %v808 = vrot.slane %v804, %v807
    %809 = vmatprep.subr.mxu0 0.0
    %810 = vmatpush1.msra.mxu0 %v788
    %811 = vmatprep.subr.mxu0 0.0
    %812 = vmatpush1.msra.mxu0 %v789
    %813 = vmatprep.subr.mxu0 0.0
    %814 = vmatpush1.msra.mxu0 %v790
    %815 = vmatprep.subr.mxu0 0.0
    %816 = vmatpush1.msra.mxu0 %v791
    %817 = vmatprep.subr.mxu0 0.0
    %818 = vmatpush1.msra.mxu0 %v792
    %819 = vmatprep.subr.mxu0 0.0
    %820 = vmatpush1.msra.mxu0 %v793
    %821 = vmatprep.subr.mxu0 0.0
    %822 = vmatpush1.msra.mxu0 %v794
    %823 = vmatprep.subr.mxu0 0.0
    %824 = vmatpush1.msra.mxu0 %v795
    %825 = vmatprep.subr.mxu0 0.0
    %826 = vmatpush1.msra.mxu0 %v796
    %827 = vmatprep.subr.mxu0 0.0
    %828 = vmatpush1.msra.mxu0 %v797
    %829 = vmatprep.subr.mxu0 0.0
    %830 = vmatpush1.msra.mxu0 %v798
    %831 = vmatprep.subr.mxu0 0.0
    %832 = vmatpush1.msra.mxu0 %v799
    %833 = vmatprep.subr.mxu0 0.0
    %834 = vmatpush1.msra.mxu0 %v800
    %835 = vmatprep.subr.mxu0 0.0
    %836 = vmatpush1.msra.mxu0 %v801
    %837 = vmatprep.subr.mxu0 0.0
    %838 = vmatpush1.msra.mxu0 %v802
    %839 = vmatprep.subr.mxu0 0.0
    %840 = vmatpush1.msra.mxu0 %v803
    %841 = vmatprep.subr.mxu0 0.0
    %842 = vmatpush1.msra.mxu0 0.0
    %843 = vmatprep.subr.mxu0 0.0
    %844 = vmatpush1.msra.mxu0 0.0
    %845 = vmatprep.subr.mxu0 0.0
    %846 = vmatpush1.msra.mxu0 0.0
    %847 = vmatprep.subr.mxu0 0.0
    %848 = vmatpush1.msra.mxu0 0.0
    %849 = vmatprep.subr.mxu0 0.0
    %850 = vmatpush1.msra.mxu0 0.0
    %851 = vmatprep.subr.mxu0 0.0
    %852 = vmatpush1.msra.mxu0 0.0
    %853 = vmatprep.subr.mxu0 0.0
    %854 = vmatpush1.msra.mxu0 0.0
    %855 = vmatprep.subr.mxu0 0.0
    %856 = vmatpush1.msra.mxu0 0.0
    %857 = vmatprep.subr.mxu0 0.0
    %858 = vmatpush1.msra.mxu0 0.0
    %859 = vmatprep.subr.mxu0 0.0
    %860 = vmatpush1.msra.mxu0 0.0
    %861 = vmatprep.subr.mxu0 0.0
    %862 = vmatpush1.msra.mxu0 0.0
    %863 = vmatprep.subr.mxu0 0.0
    %864 = vmatpush1.msra.mxu0 0.0
    %865 = vmatprep.subr.mxu0 0.0
    %866 = vmatpush1.msra.mxu0 0.0
    %867 = vmatprep.subr.mxu0 0.0
    %868 = vmatpush1.msra.mxu0 0.0
    %869 = vmatprep.subr.mxu0 0.0
    %870 = vmatpush1.msra.mxu0 0.0
    %871 = vmatprep.subr.mxu0 0.0
    %872 = vmatpush1.msra.mxu0 0.0
    %873 = vmatprep.mubr.f32.mxu0 0.0
    %874 = vmatmul.mubr.f32.gmra.mrb[0].mxu0 %v787
    %v875 = vpop.f32.mrb[0].mxu0
    %v876 = vadd.f32 %v808, %v875
    %v877 = vpop.f32.mrb[0].mxu0
    %878 = vdwg.mxu0
    %v879 = vtanh.pop %v876
    %880 = vst [vmem:[%s2] sm:$0xff] %v879
    // Predicated region
    $region14: #{text_rnn_forward.1} parent=1 // pred_check
      _
    $region15: #{text_rnn_forward.1} parent=1 // pred_check_branch
      %882 = sbr.rel (0) target = $region17
    $region16: #{text_rnn_forward.1} parent=1 // pred_region
      _
    $region17: #{text_rnn_forward.1} parent=1 // pred_fallthru
      _
    // Predicated region
    $region18: #{text_rnn_forward.1} parent=1 // pred_check
      _
    $region19: #{text_rnn_forward.1} parent=1 // pred_check_branch
      %884 = sbr.rel (0) target = $region21
    $region20: #{text_rnn_forward.1} parent=1 // pred_region
      _
    $region21: #{text_rnn_forward.1} parent=1 // pred_fallthru
      _
    %885 = vsyncpa [#allocation3], 1

</llo_original>
